<compile_context>
chip_gen: v5e
topology: v5e:2x2
jax: 0.10.0
libtpu: 0.0.40
codegen_flags: <defaults>
</compile_context>

<pallas_src>
import functools

import jax
import jax.numpy as jnp
from jax.experimental import pallas as pl
from jax.experimental.pallas import tpu as pltpu


def _round_up(a: int, b: int) -> int:
    return ((a + b - 1) // b) * b


# ---------------------------------------------------------------------------
# Kernels
# ---------------------------------------------------------------------------
def _project_kernel_full_k(x_ref, w_ref, o_ref):
    """2-D grid (i, j): full reduction dim resident in VMEM, direct store."""
    o_ref[...] = jnp.dot(
        x_ref[...], w_ref[...], preferred_element_type=jnp.float32
    ).astype(o_ref.dtype)


def _project_kernel_k_split(x_ref, w_ref, o_ref, acc_ref):
    """3-D grid (i, j, k): K is the reduction ('arbitrary') axis."""
    @pl.when(pl.program_id(2) == 0)
    def _():
        acc_ref[...] = jnp.zeros_like(acc_ref)

    acc_ref[...] += jnp.dot(
        x_ref[...], w_ref[...], preferred_element_type=jnp.float32
    )

    @pl.when(pl.program_id(2) == pl.num_programs(2) - 1)
    def _():
        o_ref[...] = acc_ref[...].astype(o_ref.dtype)


# ---------------------------------------------------------------------------
# Wrapper
# ---------------------------------------------------------------------------
def project(
    x,
    proj,
    *,
    tm: int = 256,
    tn: int = 512,
    tk: int = 512,
    compute_dtype=None,
    max_resident_vmem_bytes: int = 32 * 1024 * 1024,
):
    """y = x @ proj  (bias-free linear) as a Pallas tiled matmul."""
    orig_shape = x.shape
    K, N = proj.shape
    assert orig_shape[-1] == K, "x last dim must equal proj.shape[0]"

    out_dtype = x.dtype  # nn.Linear: output dtype follows input dtype

    x2d = x.reshape(-1, K)
    M = x2d.shape[0]

    # Optional low-precision input cast (v6e/v7x MXU peak); accumulation stays f32.
    if compute_dtype is not None:
        x2d = x2d.astype(compute_dtype)
        proj = proj.astype(compute_dtype)

    in_bytes = jnp.dtype(x2d.dtype).itemsize
    w_bytes = jnp.dtype(proj.dtype).itemsize
    out_bytes = jnp.dtype(out_dtype).itemsize

    # --- Adaptive, hardware-aligned tile sizes (collapse for small problems) ---
    tm_eff = min(tm, _round_up(M, 8))          # sublane-aligned M tile
    M_pad = _round_up(M, tm_eff)
    tn_eff = min(tn, _round_up(N, 128))        # lane-dense N tile (>=128-multiple)
    N_pad = _round_up(N, tn_eff)

    # Decide whether the whole K reduction fits in VMEM (double-buffered tiles).
    resident_bytes = (
        2 * tm_eff * K * in_bytes       # x tile (double-buffered)
        + 2 * K * tn_eff * w_bytes      # full-K weight column (double-buffered)
        + 2 * tm_eff * tn_eff * out_bytes
    )
    use_full_k = resident_bytes <= max_resident_vmem_bytes

    if use_full_k:
        # ---------------- 2-D grid: no K loop, no accumulator ----------------
        x_p = x2d if M_pad == M else jnp.pad(x2d, ((0, M_pad - M), (0, 0)))
        w_p = proj if N_pad == N else jnp.pad(proj, ((0, 0), (0, N_pad - N)))

        vmem_limit = int(min(64 * 1024 * 1024,
                             max(resident_bytes + (4 << 20), 16 << 20)))
        cost = pl.CostEstimate(
            flops=2 * M_pad * N_pad * K,
            transcendentals=0,
            bytes_accessed=(M_pad * K * in_bytes
                            + K * N_pad * w_bytes
                            + M_pad * N_pad * out_bytes),
        )

        out2d = pl.pallas_call(
            _project_kernel_full_k,
            out_shape=jax.ShapeDtypeStruct((M_pad, N_pad), out_dtype),
            grid_spec=pltpu.PrefetchScalarGridSpec(
                num_scalar_prefetch=0,
                grid=(M_pad // tm_eff, N_pad // tn_eff),
                in_specs=[
                    pl.BlockSpec((tm_eff, K), lambda i, j: (i, 0)),
                    pl.BlockSpec((K, tn_eff), lambda i, j: (0, j)),
                ],
                out_specs=pl.BlockSpec((tm_eff, tn_eff), lambda i, j: (i, j)),
            ),
            compiler_params=pltpu.CompilerParams(
                dimension_semantics=("parallel", "parallel"),
                vmem_limit_bytes=vmem_limit,
            ),
            cost_estimate=cost,
        )(x_p, w_p)
    else:
        # ---------------- 3-D grid: split K, f32 accumulator -----------------
        tk_eff = min(tk, _round_up(K, 128))    # 128-aligned K tile
        K_pad = _round_up(K, tk_eff)

        x_p = jnp.pad(x2d, ((0, M_pad - M), (0, K_pad - K)))
        w_p = jnp.pad(proj, ((0, K_pad - K), (0, N_pad - N)))

        tile_bytes = (
            2 * tm_eff * tk_eff * in_bytes       # x tile, double-buffered
            + 3 * tk_eff * tn_eff * w_bytes      # weight tile, Buffered(3)
            + tm_eff * tn_eff * 4                # f32 accumulator
            + 2 * tm_eff * tn_eff * out_bytes    # output tile, double-buffered
        )
        vmem_limit = int(min(64 * 1024 * 1024,
                             max(tile_bytes + (4 << 20), 16 << 20)))
        cost = pl.CostEstimate(
            flops=2 * M_pad * N_pad * K_pad,
            transcendentals=0,
            bytes_accessed=(M_pad * K_pad * in_bytes
                            + (M_pad // tm_eff) * K_pad * N_pad * w_bytes
                            + M_pad * N_pad * out_bytes),
        )

        out2d = pl.pallas_call(
            _project_kernel_k_split,
            out_shape=jax.ShapeDtypeStruct((M_pad, N_pad), out_dtype),
            grid_spec=pltpu.PrefetchScalarGridSpec(
                num_scalar_prefetch=0,
                grid=(M_pad // tm_eff, N_pad // tn_eff, K_pad // tk_eff),
                in_specs=[
                    pl.BlockSpec((tm_eff, tk_eff), lambda i, j, k: (i, k)),
                    pl.BlockSpec((tk_eff, tn_eff), lambda i, j, k: (k, j),
                                 pipeline_mode=pl.Buffered(3)),
                ],
                out_specs=pl.BlockSpec((tm_eff, tn_eff), lambda i, j, k: (i, j)),
                scratch_shapes=[pltpu.VMEM((tm_eff, tn_eff), jnp.float32)],
            ),
            compiler_params=pltpu.CompilerParams(
                dimension_semantics=("parallel", "parallel", "arbitrary"),
                vmem_limit_bytes=vmem_limit,
            ),
            cost_estimate=cost,
        )(x_p, w_p)

    out2d = out2d[:M, :N]
    return out2d.reshape(*orig_shape[:-1], N)


if __name__ == "__main__":
    key = jax.random.PRNGKey(0)
    kx, kp, kx2, kp2 = jax.random.split(key, 4)

    # ---- Test 1: ViT-like projection (batch=2, seq=8, in=128, out=256). ----
    # Small problem -> collapses to a single grid point, full-K resident path.
    in_features, out_features = 128, 256
    x = jax.random.normal(kx, (2, 8, in_features), dtype=jnp.float32)
    proj = jax.random.normal(kp, (in_features, out_features), dtype=jnp.float32) * 0.02

    y = jax.block_until_ready(project(x, proj))
    y_ref = x @ proj
    assert y.shape == (2, 8, out_features)
    assert jnp.allclose(y, y_ref, atol=1e-4, rtol=1e-4)

    # ---- Test 2: exercise the K-split (3-D grid) path with ragged M/N. ----
    M2, K2, N2 = 72, 1024, 384
    x2 = jax.random.normal(kx2, (M2, K2), dtype=jnp.float32)
    proj2 = jax.random.normal(kp2, (K2, N2), dtype=jnp.float32) * 0.02
    y2 = jax.block_until_ready(
        project(x2, proj2, tk=256, max_resident_vmem_bytes=0)
    )
    y2_ref = x2 @ proj2
    assert jnp.allclose(y2, y2_ref, atol=2e-3, rtol=2e-3)

    print("KERNEL_OK")
</pallas_src>

<mosaic_0001>
module attributes {stable_mosaic.version = 11 : i64} {
  func.func @_project_kernel_full_k(%arg0: i32, %arg1: i32, %arg2: memref<16x128xf32, #tpu.memory_space<vmem>>, %arg3: memref<128x256xf32, #tpu.memory_space<vmem>>, %arg4: memref<16x256xf32, #tpu.memory_space<vmem>>) attributes {dimension_semantics = [#tpu.dimension_semantics<parallel>, #tpu.dimension_semantics<parallel>], iteration_bounds = array<i64: 1, 1>, scalar_prefetch = 0 : i64, scratch_operands = 0 : i64, tpu.core_type = #tpu.core_type<tc>, window_params = [{transform_indices = @transform_0, window_bounds = array<i64: 16, 128>}, {transform_indices = @transform_1, window_bounds = array<i64: 128, 256>}, {transform_indices = @transform_2, window_bounds = array<i64: 16, 256>}]} {
    %c0 = arith.constant 0 : index
    %c0_0 = arith.constant 0 : index
    %0 = vector.load %arg2[%c0, %c0_0] : memref<16x128xf32, #tpu.memory_space<vmem>>, vector<16x128xf32>
    %c0_1 = arith.constant 0 : index
    %c0_2 = arith.constant 0 : index
    %1 = vector.load %arg3[%c0_1, %c0_2] : memref<128x256xf32, #tpu.memory_space<vmem>>, vector<128x256xf32>
    %cst = arith.constant dense<0.000000e+00> : vector<16x256xf32>
    %2 = tpu.matmul %0, %1, %cst {dimension_numbers = #tpu.dot_dimension_numbers<[1], [0], [0], [1], [0, 0, 1, 1], [], []>} : vector<16x128xf32>, vector<128x256xf32>, vector<16x256xf32> -> vector<16x256xf32>
    %c0_3 = arith.constant 0 : index
    %c0_4 = arith.constant 0 : index
    %3 = vector.load %arg4[%c0_3, %c0_4] : memref<16x256xf32, #tpu.memory_space<vmem>>, vector<16x256xf32>
    tpu.vector_store %arg4[%c0_3, %c0_4], %2 {strides = array<i32>} : memref<16x256xf32, #tpu.memory_space<vmem>>, vector<16x256xf32>,
    return
  }
  func.func @transform_0(%arg0: i32, %arg1: i32) -> (i32, i32) {
    %c0_i32 = arith.constant 0 : i32
    %c0_i32_0 = arith.constant 0 : i32
    return %arg0, %c0_i32 : i32, i32
  }
  func.func @transform_1(%arg0: i32, %arg1: i32) -> (i32, i32) {
    %c0_i32 = arith.constant 0 : i32
    %c0_i32_0 = arith.constant 0 : i32
    return %c0_i32, %arg1 : i32, i32
  }
  func.func @transform_2(%arg0: i32, %arg1: i32) -> (i32, i32) {
    %c0_i32 = arith.constant 0 : i32
    return %arg0, %arg1 : i32, i32
  }
}

</mosaic_0001>

<llo_original>
// kernel: tpu_custom_call.1
$region0: #{tpu_custom_call.1}
  #allocation0 [shape = 'u32[]', space=smem, size = 0x4, offset = 0x4, fixed_abs, tag = 'smem constant byte address 0x4 - core index']
  #allocation1 [shape = 'u32[72,128]{1,0:T(1,128)}', space=vmem, size = 0x9000, scoped, tag = 'internal scratch']
  %s0 = inlined_call_operand.hbm [shape: f32[16,128], index: 0, kind: input, shape index: {}]
  %s1 = inlined_call_operand.hbm [shape: f32[128,256], index: 1, kind: input, shape index: {}]
  %s2 = inlined_call_operand.hbm [shape: f32[16,256], index: 2, kind: output, shape index: {}]
  %s3 = sld [smem:[#allocation0]]
  $region26: #{tpu_custom_call.1} parent=0
    _
  %s5 = ssub.s32 1, %s3
  %s6 = scalar_select 0, %s5, %s3
  $region1: #{tpu_custom_call.1} parent=0
    #allocation2 [shape = 'u8[8192]{0}', space=vmem, size = 0x2000, scoped, tag = 'input window, operand 0, single buffered']
    #allocation3 [shape = 's32[1]{0}', space=sflag, size = 0x4, scoped, tag = 'scoped memory for tpu_custom_call.1']
    #allocation4 [shape = 's32[1]{0}', space=sflag, size = 0x4, scoped, tag = 'scoped memory for tpu_custom_call.1']
    #allocation5 [shape = 'u8[131072]{0}', space=vmem, size = 0x20000, scoped, tag = 'input window, operand 1, single buffered']
    #allocation6 [shape = 's32[1]{0}', space=sflag, size = 0x4, scoped, tag = 'scoped memory for tpu_custom_call.1']
    #allocation7 [shape = 'u8[16384]{0}', space=vmem, size = 0x4000, scoped, tag = 'output window, operand 0, single buffered']
    %7 = vsyncpa [#allocation3], 0
    %8 = vsyncpa [#allocation6], 0
    %9 = vsyncpa [#allocation4], 0
    // Predicated region
    $region2: #{tpu_custom_call.1} parent=1 // pred_check
      _
    $region3: #{tpu_custom_call.1} parent=1 // pred_check_branch
      %11 = sbr.rel (0) target = $region5
    $region4: #{tpu_custom_call.1} parent=1 // pred_region
      %13 = vsyncadd [#allocation3], 0
      %s14 = sshll.u32 %s0, 4
      %s15 = int_to_ptr.hbm [resolvable:$true] %s14
      %s16 = sshll.u32 [#allocation2], 4
      %s17 = int_to_ptr.vmem [resolvable:$true] %s16
      %22 = dma.hbm_to_vmem [thread:$0]  %s15, 256, %s17, [#allocation3], 128, 128, 8
    $region5: #{tpu_custom_call.1} parent=1 // pred_fallthru
      _
    // Predicated region
    $region6: #{tpu_custom_call.1} parent=1 // pred_check
      _
    $region7: #{tpu_custom_call.1} parent=1 // pred_check_branch
      %24 = sbr.rel (0) target = $region9
    $region8: #{tpu_custom_call.1} parent=1 // pred_region
      %26 = vsyncadd [#allocation6], 0
      %s27 = sshll.u32 %s1, 4
      %s28 = int_to_ptr.hbm [resolvable:$true] %s27
      %s29 = sshll.u32 [#allocation5], 4
      %s30 = int_to_ptr.vmem [resolvable:$true] %s29
      %35 = dma.hbm_to_vmem [thread:$0]  %s28, 4096, %s30, [#allocation6], 256, 256, 16
    $region9: #{tpu_custom_call.1} parent=1 // pred_fallthru
      _
    // Predicated region
    $region10: #{tpu_custom_call.1} parent=1 // pred_check
      _
    $region11: #{tpu_custom_call.1} parent=1 // pred_check_branch
      %37 = sbr.rel (0) target = $region13
    $region12: #{tpu_custom_call.1} parent=1 // pred_region
      %39 = dma.done [#allocation3], 256
    $region13: #{tpu_custom_call.1} parent=1 // pred_fallthru
      _
    // Predicated region
    $region14: #{tpu_custom_call.1} parent=1 // pred_check
      _
    $region15: #{tpu_custom_call.1} parent=1 // pred_check_branch
      %41 = sbr.rel (0) target = $region17
    $region16: #{tpu_custom_call.1} parent=1 // pred_region
      %43 = dma.done [#allocation6], 4096
    $region17: #{tpu_custom_call.1} parent=1 // pred_fallthru
      _
    %v44 = vld [vmem:[#allocation2] sm:$0xff]
    %v45 = vld [vmem:[#allocation2 + $0x8] sm:$0xff]
    %v46 = vld [vmem:[#allocation5] sm:$0xff]
    %v47 = vld [vmem:[#allocation5 + $0x8] sm:$0xff]
    %v48 = vld [vmem:[#allocation5 + $0x10] sm:$0xff]
    %v49 = vld [vmem:[#allocation5 + $0x18] sm:$0xff]
    %v50 = vld [vmem:[#allocation5 + $0x20] sm:$0xff]
    %v51 = vld [vmem:[#allocation5 + $0x28] sm:$0xff]
    %v52 = vld [vmem:[#allocation5 + $0x30] sm:$0xff]
    %v53 = vld [vmem:[#allocation5 + $0x38] sm:$0xff]
    %v54 = vld [vmem:[#allocation5 + $0x40] sm:$0xff]
    %v55 = vld [vmem:[#allocation5 + $0x48] sm:$0xff]
    %v56 = vld [vmem:[#allocation5 + $0x50] sm:$0xff]
    %v57 = vld [vmem:[#allocation5 + $0x58] sm:$0xff]
    %v58 = vld [vmem:[#allocation5 + $0x60] sm:$0xff]
    %v59 = vld [vmem:[#allocation5 + $0x68] sm:$0xff]
    %v60 = vld [vmem:[#allocation5 + $0x70] sm:$0xff]
    %v61 = vld [vmem:[#allocation5 + $0x78] sm:$0xff]
    %v62 = vld [vmem:[#allocation5 + $0x80] sm:$0xff]
    %v63 = vld [vmem:[#allocation5 + $0x88] sm:$0xff]
    %v64 = vld [vmem:[#allocation5 + $0x90] sm:$0xff]
    %v65 = vld [vmem:[#allocation5 + $0x98] sm:$0xff]
    %v66 = vld [vmem:[#allocation5 + $0xa0] sm:$0xff]
    %v67 = vld [vmem:[#allocation5 + $0xa8] sm:$0xff]
    %v68 = vld [vmem:[#allocation5 + $0xb0] sm:$0xff]
    %v69 = vld [vmem:[#allocation5 + $0xb8] sm:$0xff]
    %v70 = vld [vmem:[#allocation5 + $0xc0] sm:$0xff]
    %v71 = vld [vmem:[#allocation5 + $0xc8] sm:$0xff]
    %v72 = vld [vmem:[#allocation5 + $0xd0] sm:$0xff]
    %v73 = vld [vmem:[#allocation5 + $0xd8] sm:$0xff]
    %v74 = vld [vmem:[#allocation5 + $0xe0] sm:$0xff]
    %v75 = vld [vmem:[#allocation5 + $0xe8] sm:$0xff]
    %v76 = vld [vmem:[#allocation5 + $0xf0] sm:$0xff]
    %v77 = vld [vmem:[#allocation5 + $0xf8] sm:$0xff]
    %78 = vmatpush.msra.mxu0 %v76
    %79 = vmatpush.msra.mxu0 %v74
    %80 = vmatpush.msra.mxu0 %v72
    %81 = vmatpush.msra.mxu0 %v70
    %82 = vmatpush.msra.mxu0 %v68
    %83 = vmatpush.msra.mxu0 %v66
    %84 = vmatpush.msra.mxu0 %v64
    %85 = vmatpush.msra.mxu0 %v62
    %86 = vmatpush.msra.mxu0 %v60
    %87 = vmatpush.msra.mxu0 %v58
    %88 = vmatpush.msra.mxu0 %v56
    %89 = vmatpush.msra.mxu0 %v54
    %90 = vmatpush.msra.mxu0 %v52
    %91 = vmatpush.msra.mxu0 %v50
    %92 = vmatpush.msra.mxu0 %v48
    %93 = vmatpush.msra.mxu0 %v46
    %94 = vmatmul.f32.gmra.mxu0 %v44
    %v95 = vpop.f32.mrf.mxu0
    %v96 = vadd.f32 0.0, %v95
    %97 = vmatmul.f32.gmra.mxu0 %v45
    %v98 = vpop.f32.mrf.mxu0
    %v99 = vadd.f32 0.0, %v98
    %100 = vdwg.mxu0
    %101 = vmatpush.msra.mxu0 %v77
    %102 = vmatpush.msra.mxu0 %v75
    %103 = vmatpush.msra.mxu0 %v73
    %104 = vmatpush.msra.mxu0 %v71
    %105 = vmatpush.msra.mxu0 %v69
    %106 = vmatpush.msra.mxu0 %v67
    %107 = vmatpush.msra.mxu0 %v65
    %108 = vmatpush.msra.mxu0 %v63
    %109 = vmatpush.msra.mxu0 %v61
    %110 = vmatpush.msra.mxu0 %v59
    %111 = vmatpush.msra.mxu0 %v57
    %112 = vmatpush.msra.mxu0 %v55
    %113 = vmatpush.msra.mxu0 %v53
    %114 = vmatpush.msra.mxu0 %v51
    %115 = vmatpush.msra.mxu0 %v49
    %116 = vmatpush.msra.mxu0 %v47
    %117 = vmatmul.f32.gmra.mxu0 %v44
    %v118 = vpop.f32.mrf.mxu0
    %v119 = vadd.f32 0.0, %v118
    %120 = vmatmul.f32.gmra.mxu0 %v45
    %v121 = vpop.f32.mrf.mxu0
    %v122 = vadd.f32 0.0, %v121
    %123 = vdwg.mxu0
    %124 = vst [vmem:[#allocation7] sm:$0xff] %v96
    %125 = vst [vmem:[#allocation7 + $0x8] sm:$0xff] %v119
    %126 = vst [vmem:[#allocation7 + $0x10] sm:$0xff] %v99
    %127 = vst [vmem:[#allocation7 + $0x18] sm:$0xff] %v122
    // Predicated region
    $region18: #{tpu_custom_call.1} parent=1 // pred_check
      _
    $region19: #{tpu_custom_call.1} parent=1 // pred_check_branch
      %129 = sbr.rel (0) target = $region21
    $region20: #{tpu_custom_call.1} parent=1 // pred_region
      %131 = vsyncadd [#allocation4], 0
      %s132 = sshll.u32 [#allocation7], 4
      %s133 = int_to_ptr.vmem [resolvable:$true] %s132
      %s134 = sshll.u32 %s2, 4
      %s135 = int_to_ptr.hbm [resolvable:$true] %s134
      %140 = dma.vmem_to_hbm [thread:$0]  %s133, 512, %s135, [#allocation4], 256, 256, 16
    $region21: #{tpu_custom_call.1} parent=1 // pred_fallthru
      _
    // Predicated region
    $region22: #{tpu_custom_call.1} parent=1 // pred_check
      _
    $region23: #{tpu_custom_call.1} parent=1 // pred_check_branch
      %142 = sbr.rel (0) target = $region25
    $region24: #{tpu_custom_call.1} parent=1 // pred_region
      %144 = dma.done [#allocation4], 512
    $region25: #{tpu_custom_call.1} parent=1 // pred_fallthru
      _
    %145 = vsyncpa [#allocation3], 1
    %146 = vsyncpa [#allocation6], 1
    %147 = vsyncpa [#allocation4], 1

</llo_original>
